<compile_context>
chip_gen: v7x
topology: tpu7x:2x2x1
jax: 0.10.0
libtpu: 0.0.40
codegen_flags: <defaults>
</compile_context>

<pallas_src>
import functools

import jax
import jax.numpy as jnp
from jax.experimental import pallas as pl
from jax.experimental.pallas import tpu as pltpu


# ----------------------------- Pallas kernel ------------------------------ #

def _fused_mlp_kernel(x_ref, t_ref,
                      w1x_ref, embw1_ref, b1_ref,
                      w2_ref, b2_ref,
                      w3_ref, b3_ref,
                      w4_ref, b4_ref,
                      o_ref):
    """Fused: cast + timestep-embedding lookup + (Linear+ReLU)x3 + Linear."""
    x = x_ref[...].astype(jnp.float32)          # [Bt, input_dim]  (x_t.float())
    t = t_ref[...]                              # [Bt, 1] int32 timesteps
    bt = x.shape[0]
    num_emb = embw1_ref.shape[0]                # num_timesteps + 2

    # One-hot select of the precomputed (emb_table @ W1_t) row: replaces the
    # XLA embedding gather + concat + the lane-sparse timestep half of matmul 1.
    onehot = (t == jax.lax.broadcasted_iota(jnp.int32, (bt, num_emb), 1)
              ).astype(jnp.float32)             # [Bt, num_emb]

    h = (jnp.dot(x, w1x_ref[...], preferred_element_type=jnp.float32)
         + jnp.dot(onehot, embw1_ref[...], preferred_element_type=jnp.float32)
         + b1_ref[...])
    h = jnp.maximum(h, 0.0)

    h = jnp.dot(h, w2_ref[...], preferred_element_type=jnp.float32) + b2_ref[...]
    h = jnp.maximum(h, 0.0)

    h = jnp.dot(h, w3_ref[...], preferred_element_type=jnp.float32) + b3_ref[...]
    h = jnp.maximum(h, 0.0)

    out = jnp.dot(h, w4_ref[...], preferred_element_type=jnp.float32) + b4_ref[...]
    o_ref[...] = out.astype(o_ref.dtype)


# ------------------------------ Param prep --------------------------------- #

def init_params(key, input_dim, num_categories, num_timesteps,
                timestep_dim=2, layers=(128, 128, 128)):
    """Deterministic init mimicking PyTorch defaults (uniform +/- 1/sqrt(fan_in))."""
    dims = [input_dim + timestep_dim] + list(layers) + [num_categories * input_dim]
    params = []
    keys = jax.random.split(key, 2 * (len(dims) - 1) + 1)
    for i in range(len(dims) - 1):
        fan_in, fan_out = dims[i], dims[i + 1]
        bound = 1.0 / (fan_in ** 0.5)
        w = jax.random.uniform(keys[2 * i], (fan_in, fan_out),
                               minval=-bound, maxval=bound, dtype=jnp.float32)
        b = jax.random.uniform(keys[2 * i + 1], (1, fan_out),
                               minval=-bound, maxval=bound, dtype=jnp.float32)
        params.append((w, b))
    # Embedding table: (num_timesteps + 2, timestep_dim), N(0, 1) like nn.Embedding.
    emb = jax.random.normal(keys[-1], (num_timesteps + 2, timestep_dim),
                            dtype=jnp.float32)
    return params, emb


def prepare_fused_params(params, emb_table, input_dim):
    """One-time prep: split W1 and fold the embedding table through W1_t."""
    (w1, b1), (w2, b2), (w3, b3), (w4, b4) = params
    w1x = w1[:input_dim]                       # [input_dim, H]
    w1t = w1[input_dim:]                       # [timestep_dim, H]
    emb_w1 = emb_table @ w1t                   # [num_timesteps + 2, H]
    return (w1x, emb_w1, b1, w2, b2, w3, b3, w4, b4)


# ------------------------------- Forward ----------------------------------- #

def _round_up(x, m):
    return ((x + m - 1) // m) * m


@functools.partial(jax.jit, static_argnames=("input_dim", "num_categories"))
def diffusion_model_forward(x_t, t, fused_params, *, input_dim, num_categories):
    """Equivalent of DiffusionModel.forward.

    x_t: [B, input_dim] (any numeric dtype; cast to float32 in-kernel)
    t:   [B] integer timestep indices
    returns: [B, input_dim, num_categories] float32 logits
    """
    w1x, emb_w1, b1, w2, b2, w3, b3, w4, b4 = fused_params
    B = x_t.shape[0]
    out_dim = num_categories * input_dim

    # Batch tiling: one grid step for small B (padded to a sublane multiple of 8),
    # 256-row tiles when B scales up (pipelined + megacore-parallel).
    B_TILE = 256 if B >= 256 else _round_up(B, 8)
    Bp = _round_up(B, B_TILE)

    x = x_t
    t32 = t.astype(jnp.int32)
    if Bp != B:
        x = jnp.pad(x, ((0, Bp - B), (0, 0)))
        t32 = jnp.pad(t32, (0, Bp - B))        # padded rows use timestep 0, sliced off
    t2 = t32.reshape(Bp, 1)

    n_tiles = Bp // B_TILE
    const_spec = lambda a: pl.BlockSpec(a.shape, lambda i: (0,) * a.ndim)

    logits_flat = pl.pallas_call(
        _fused_mlp_kernel,
        out_shape=jax.ShapeDtypeStruct((Bp, out_dim), jnp.float32),
        grid=(n_tiles,),
        in_specs=[
            pl.BlockSpec((B_TILE, input_dim), lambda i: (i, 0)),   # x
            pl.BlockSpec((B_TILE, 1), lambda i: (i, 0)),           # t
            const_spec(w1x), const_spec(emb_w1), const_spec(b1),   # weights stay resident
            const_spec(w2), const_spec(b2),
            const_spec(w3), const_spec(b3),
            const_spec(w4), const_spec(b4),
        ],
        out_specs=pl.BlockSpec((B_TILE, out_dim), lambda i: (i, 0)),
        compiler_params=pltpu.CompilerParams(
            dimension_semantics=("parallel",)),
    )(x, t2, w1x, emb_w1, b1, w2, b2, w3, b3, w4, b4)

    return logits_flat[:B].reshape(-1, input_dim, num_categories)


# --------------------------------- Demo ------------------------------------ #

if __name__ == "__main__":
    input_dim = 4
    num_categories = 8
    num_timesteps = 10
    timestep_dim = 2
    layers = (128, 128, 128)
    batch = 8

    key = jax.random.PRNGKey(0)
    k_params, k_x, k_t = jax.random.split(key, 3)

    params, emb_table = init_params(k_params, input_dim, num_categories,
                                    num_timesteps, timestep_dim, layers)
    fused_params = prepare_fused_params(params, emb_table, input_dim)

    # x_t are categorical states (ints), cast to float inside the kernel, like PyTorch.
    x_t = jax.random.randint(k_x, (batch, input_dim), 0, num_categories,
                             dtype=jnp.int32)
    t = jax.random.randint(k_t, (batch,), 0, num_timesteps, dtype=jnp.int32)

    out = diffusion_model_forward(x_t, t, fused_params,
                                  input_dim=input_dim,
                                  num_categories=num_categories)
    out = jax.block_until_ready(out)

    assert out.shape == (batch, input_dim, num_categories), out.shape
    assert out.dtype == jnp.float32

    # Pure-JAX reference (original concat-based formulation).
    x_cat = jnp.concatenate([x_t.astype(jnp.float32), emb_table[t]], axis=1)
    h = x_cat
    for i, (w, b) in enumerate(params):
        h = h @ w + b
        if i < len(params) - 1:
            h = jnp.maximum(h, 0.0)
    ref = h.reshape(-1, input_dim, num_categories)
    assert jnp.allclose(out, ref, atol=1e-4, rtol=1e-4), (
        float(jnp.max(jnp.abs(out - ref))))

    print("KERNEL_OK")
</pallas_src>

<mosaic_0001>
module attributes {stable_mosaic.version = 11 : i64} {
  func.func @_fused_mlp_kernel(%arg0: i32, %arg1: memref<8x4xi32, #tpu.memory_space<vmem>>, %arg2: memref<8x1xi32, #tpu.memory_space<vmem>>, %arg3: memref<4x128xf32, #tpu.memory_space<vmem>>, %arg4: memref<12x128xf32, #tpu.memory_space<vmem>>, %arg5: memref<1x128xf32, #tpu.memory_space<vmem>>, %arg6: memref<128x128xf32, #tpu.memory_space<vmem>>, %arg7: memref<1x128xf32, #tpu.memory_space<vmem>>, %arg8: memref<128x128xf32, #tpu.memory_space<vmem>>, %arg9: memref<1x128xf32, #tpu.memory_space<vmem>>, %arg10: memref<128x32xf32, #tpu.memory_space<vmem>>, %arg11: memref<1x32xf32, #tpu.memory_space<vmem>>, %arg12: memref<8x32xf32, #tpu.memory_space<vmem>>) attributes {dimension_semantics = [#tpu.dimension_semantics<parallel>], iteration_bounds = array<i64: 1>, scalar_prefetch = 0 : i64, scratch_operands = 0 : i64, tpu.core_type = #tpu.core_type<tc>, window_params = [{transform_indices = @transform_0, window_bounds = array<i64: 8, 4>}, {transform_indices = @transform_1, window_bounds = array<i64: 8, 1>}, {pipeline_mode = #tpu.pipeline_mode<synchronous>, transform_indices = @transform_2, window_bounds = array<i64: 4, 128>}, {pipeline_mode = #tpu.pipeline_mode<synchronous>, transform_indices = @transform_3, window_bounds = array<i64: 12, 128>}, {pipeline_mode = #tpu.pipeline_mode<synchronous>, transform_indices = @transform_4, window_bounds = array<i64: 1, 128>}, {pipeline_mode = #tpu.pipeline_mode<synchronous>, transform_indices = @transform_5, window_bounds = array<i64: 128, 128>}, {pipeline_mode = #tpu.pipeline_mode<synchronous>, transform_indices = @transform_6, window_bounds = array<i64: 1, 128>}, {pipeline_mode = #tpu.pipeline_mode<synchronous>, transform_indices = @transform_7, window_bounds = array<i64: 128, 128>}, {pipeline_mode = #tpu.pipeline_mode<synchronous>, transform_indices = @transform_8, window_bounds = array<i64: 1, 128>}, {pipeline_mode = #tpu.pipeline_mode<synchronous>, transform_indices = @transform_9, window_bounds = array<i64: 128, 32>}, {pipeline_mode = #tpu.pipeline_mode<synchronous>, transform_indices = @transform_10, window_bounds = array<i64: 1, 32>}, {transform_indices = @transform_11, window_bounds = array<i64: 8, 32>}]} {
    %c0 = arith.constant 0 : index
    %c0_0 = arith.constant 0 : index
    %0 = vector.load %arg1[%c0, %c0_0] : memref<8x4xi32, #tpu.memory_space<vmem>>, vector<8x4xi32>
    %1 = arith.sitofp %0 : vector<8x4xi32> to vector<8x4xf32>
    %c0_1 = arith.constant 0 : index
    %c0_2 = arith.constant 0 : index
    %2 = vector.load %arg2[%c0_1, %c0_2] : memref<8x1xi32, #tpu.memory_space<vmem>>, vector<8x1xi32>
    %3 = tpu.iota {dimensions = array<i32: 1>} : vector<8x12xi32>
    %4 = vector.broadcast %2 : vector<8x1xi32> to vector<8x12xi32>
    %5 = arith.cmpi eq, %4, %3 : vector<8x12xi32>
    %6 = arith.extui %5 : vector<8x12xi1> to vector<8x12xi32>
    %7 = arith.sitofp %6 : vector<8x12xi32> to vector<8x12xf32>
    %c0_3 = arith.constant 0 : index
    %c0_4 = arith.constant 0 : index
    %8 = vector.load %arg3[%c0_3, %c0_4] : memref<4x128xf32, #tpu.memory_space<vmem>>, vector<4x128xf32>
    %cst = arith.constant dense<0.000000e+00> : vector<8x128xf32>
    %9 = tpu.matmul %1, %8, %cst {dimension_numbers = #tpu.dot_dimension_numbers<[1], [0], [0], [1], [0, 0, 1, 1], [], []>} : vector<8x4xf32>, vector<4x128xf32>, vector<8x128xf32> -> vector<8x128xf32>
    %c0_5 = arith.constant 0 : index
    %c0_6 = arith.constant 0 : index
    %10 = vector.load %arg4[%c0_5, %c0_6] : memref<12x128xf32, #tpu.memory_space<vmem>>, vector<12x128xf32>
    %cst_7 = arith.constant dense<0.000000e+00> : vector<8x128xf32>
    %11 = tpu.matmul %7, %10, %cst_7 {dimension_numbers = #tpu.dot_dimension_numbers<[1], [0], [0], [1], [0, 0, 1, 1], [], []>} : vector<8x12xf32>, vector<12x128xf32>, vector<8x128xf32> -> vector<8x128xf32>
    %12 = arith.addf %9, %11 : vector<8x128xf32>
    %c0_8 = arith.constant 0 : index
    %c0_9 = arith.constant 0 : index
    %13 = vector.load %arg5[%c0_8, %c0_9] : memref<1x128xf32, #tpu.memory_space<vmem>>, vector<1x128xf32>
    %14 = vector.broadcast %13 : vector<1x128xf32> to vector<8x128xf32>
    %15 = arith.addf %12, %14 : vector<8x128xf32>
    %cst_10 = arith.constant 0.000000e+00 : f32
    %16 = vector.broadcast %cst_10 : f32 to vector<8x128xf32>
    %17 = arith.maximumf %15, %16 : vector<8x128xf32>
    %c0_11 = arith.constant 0 : index
    %c0_12 = arith.constant 0 : index
    %18 = vector.load %arg6[%c0_11, %c0_12] : memref<128x128xf32, #tpu.memory_space<vmem>>, vector<128x128xf32>
    %cst_13 = arith.constant dense<0.000000e+00> : vector<8x128xf32>
    %19 = tpu.matmul %17, %18, %cst_13 {dimension_numbers = #tpu.dot_dimension_numbers<[1], [0], [0], [1], [0, 0, 1, 1], [], []>} : vector<8x128xf32>, vector<128x128xf32>, vector<8x128xf32> -> vector<8x128xf32>
    %c0_14 = arith.constant 0 : index
    %c0_15 = arith.constant 0 : index
    %20 = vector.load %arg7[%c0_14, %c0_15] : memref<1x128xf32, #tpu.memory_space<vmem>>, vector<1x128xf32>
    %21 = vector.broadcast %20 : vector<1x128xf32> to vector<8x128xf32>
    %22 = arith.addf %19, %21 : vector<8x128xf32>
    %cst_16 = arith.constant 0.000000e+00 : f32
    %23 = vector.broadcast %cst_16 : f32 to vector<8x128xf32>
    %24 = arith.maximumf %22, %23 : vector<8x128xf32>
    %c0_17 = arith.constant 0 : index
    %c0_18 = arith.constant 0 : index
    %25 = vector.load %arg8[%c0_17, %c0_18] : memref<128x128xf32, #tpu.memory_space<vmem>>, vector<128x128xf32>
    %cst_19 = arith.constant dense<0.000000e+00> : vector<8x128xf32>
    %26 = tpu.matmul %24, %25, %cst_19 {dimension_numbers = #tpu.dot_dimension_numbers<[1], [0], [0], [1], [0, 0, 1, 1], [], []>} : vector<8x128xf32>, vector<128x128xf32>, vector<8x128xf32> -> vector<8x128xf32>
    %c0_20 = arith.constant 0 : index
    %c0_21 = arith.constant 0 : index
    %27 = vector.load %arg9[%c0_20, %c0_21] : memref<1x128xf32, #tpu.memory_space<vmem>>, vector<1x128xf32>
    %28 = vector.broadcast %27 : vector<1x128xf32> to vector<8x128xf32>
    %29 = arith.addf %26, %28 : vector<8x128xf32>
    %cst_22 = arith.constant 0.000000e+00 : f32
    %30 = vector.broadcast %cst_22 : f32 to vector<8x128xf32>
    %31 = arith.maximumf %29, %30 : vector<8x128xf32>
    %c0_23 = arith.constant 0 : index
    %c0_24 = arith.constant 0 : index
    %32 = vector.load %arg10[%c0_23, %c0_24] : memref<128x32xf32, #tpu.memory_space<vmem>>, vector<128x32xf32>
    %cst_25 = arith.constant dense<0.000000e+00> : vector<8x32xf32>
    %33 = tpu.matmul %31, %32, %cst_25 {dimension_numbers = #tpu.dot_dimension_numbers<[1], [0], [0], [1], [0, 0, 1, 1], [], []>} : vector<8x128xf32>, vector<128x32xf32>, vector<8x32xf32> -> vector<8x32xf32>
    %c0_26 = arith.constant 0 : index
    %c0_27 = arith.constant 0 : index
    %34 = vector.load %arg11[%c0_26, %c0_27] : memref<1x32xf32, #tpu.memory_space<vmem>>, vector<1x32xf32>
    %35 = vector.broadcast %34 : vector<1x32xf32> to vector<8x32xf32>
    %36 = arith.addf %33, %35 : vector<8x32xf32>
    %c0_28 = arith.constant 0 : index
    %c0_29 = arith.constant 0 : index
    %37 = vector.load %arg12[%c0_28, %c0_29] : memref<8x32xf32, #tpu.memory_space<vmem>>, vector<8x32xf32>
    tpu.vector_store %arg12[%c0_28, %c0_29], %36 {strides = array<i32>} : memref<8x32xf32, #tpu.memory_space<vmem>>, vector<8x32xf32>,
    return
  }
  func.func @transform_0(%arg0: i32) -> (i32, i32) {
    %c0_i32 = arith.constant 0 : i32
    %c0_i32_0 = arith.constant 0 : i32
    return %arg0, %c0_i32 : i32, i32
  }
  func.func @transform_1(%arg0: i32) -> (i32, i32) {
    %c0_i32 = arith.constant 0 : i32
    %c0_i32_0 = arith.constant 0 : i32
    return %arg0, %c0_i32 : i32, i32
  }
  func.func @transform_2(%arg0: i32) -> (i32, i32) {
    %c0_i32 = arith.constant 0 : i32
    %c0_i32_0 = arith.constant 0 : i32
    %c0_i32_1 = arith.constant 0 : i32
    return %c0_i32, %c0_i32_0 : i32, i32
  }
  func.func @transform_3(%arg0: i32) -> (i32, i32) {
    %c0_i32 = arith.constant 0 : i32
    %c0_i32_0 = arith.constant 0 : i32
    %c0_i32_1 = arith.constant 0 : i32
    return %c0_i32, %c0_i32_0 : i32, i32
  }
  func.func @transform_4(%arg0: i32) -> (i32, i32) {
    %c0_i32 = arith.constant 0 : i32
    %c0_i32_0 = arith.constant 0 : i32
    %c0_i32_1 = arith.constant 0 : i32
    return %c0_i32, %c0_i32_0 : i32, i32
  }
  func.func @transform_5(%arg0: i32) -> (i32, i32) {
    %c0_i32 = arith.constant 0 : i32
    %c0_i32_0 = arith.constant 0 : i32
    %c0_i32_1 = arith.constant 0 : i32
    return %c0_i32, %c0_i32_0 : i32, i32
  }
  func.func @transform_6(%arg0: i32) -> (i32, i32) {
    %c0_i32 = arith.constant 0 : i32
    %c0_i32_0 = arith.constant 0 : i32
    %c0_i32_1 = arith.constant 0 : i32
    return %c0_i32, %c0_i32_0 : i32, i32
  }
  func.func @transform_7(%arg0: i32) -> (i32, i32) {
    %c0_i32 = arith.constant 0 : i32
    %c0_i32_0 = arith.constant 0 : i32
    %c0_i32_1 = arith.constant 0 : i32
    return %c0_i32, %c0_i32_0 : i32, i32
  }
  func.func @transform_8(%arg0: i32) -> (i32, i32) {
    %c0_i32 = arith.constant 0 : i32
    %c0_i32_0 = arith.constant 0 : i32
    %c0_i32_1 = arith.constant 0 : i32
    return %c0_i32, %c0_i32_0 : i32, i32
  }
  func.func @transform_9(%arg0: i32) -> (i32, i32) {
    %c0_i32 = arith.constant 0 : i32
    %c0_i32_0 = arith.constant 0 : i32
    %c0_i32_1 = arith.constant 0 : i32
    return %c0_i32, %c0_i32_0 : i32, i32
  }
  func.func @transform_10(%arg0: i32) -> (i32, i32) {
    %c0_i32 = arith.constant 0 : i32
    %c0_i32_0 = arith.constant 0 : i32
    %c0_i32_1 = arith.constant 0 : i32
    return %c0_i32, %c0_i32_0 : i32, i32
  }
  func.func @transform_11(%arg0: i32) -> (i32, i32) {
    %c0_i32 = arith.constant 0 : i32
    %c0_i32_0 = arith.constant 0 : i32
    return %arg0, %c0_i32 : i32, i32
  }
}

</mosaic_0001>

<llo_original>
// kernel: diffusion_model_forward.1
$region0: #{diffusion_model_forward.1}
  #allocation0 [shape = 'u32[]', space=smem, size = 0x4, offset = 0x4, fixed_abs, tag = 'smem constant byte address 0x4 - core index']
  #allocation1 [shape = 'u32[144,128]{1,0:T(1,128)}', space=vmem, size = 0x12000, scoped, tag = 'internal scratch']
  %s0 = inlined_call_operand.vmem [shape: s32[8,4], index: 0, kind: input, shape index: {}]
  %s1 = inlined_call_operand.vmem [shape: s32[8,1], index: 1, kind: input, shape index: {}]
  %s2 = inlined_call_operand.vmem [shape: f32[4,128], index: 2, kind: input, shape index: {}]
  %s3 = inlined_call_operand.vmem [shape: f32[12,128], index: 3, kind: input, shape index: {}]
  %s4 = inlined_call_operand.vmem [shape: f32[1,128], index: 4, kind: input, shape index: {}]
  %s5 = inlined_call_operand.vmem [shape: f32[128,128], index: 5, kind: input, shape index: {}]
  %s6 = inlined_call_operand.vmem [shape: f32[1,128], index: 6, kind: input, shape index: {}]
  %s7 = inlined_call_operand.hbm [shape: f32[128,128], index: 7, kind: input, shape index: {}]
  %s8 = inlined_call_operand.vmem [shape: f32[1,128], index: 8, kind: input, shape index: {}]
  %s9 = inlined_call_operand.vmem [shape: f32[128,32], index: 9, kind: input, shape index: {}]
  %s10 = inlined_call_operand.vmem [shape: f32[1,32], index: 10, kind: input, shape index: {}]
  %s11 = inlined_call_operand.vmem [shape: f32[8,32], index: 11, kind: output, shape index: {}]
  %s12 = sld [smem:[#allocation0]]
  $region58: #{diffusion_model_forward.1} parent=0
    _
  %s14 = ssub.s32 1, %s12
  %s15 = scalar_select 0, %s14, %s12
  $region1: #{diffusion_model_forward.1} parent=0
    #allocation2 [shape = 'u8[65536]{0}', space=vmem, size = 0x10000, scoped, tag = 'input window, operand 7, single buffered']
    #allocation3 [shape = 's32[1]{0}', space=sflag, size = 0x4, scoped, tag = 'scoped memory for diffusion_model_forward.1']
    %16 = vsyncpa [#allocation3], 0
    // Predicated region
    $region2: #{diffusion_model_forward.1} parent=1 // pred_check
      _
    $region3: #{diffusion_model_forward.1} parent=1 // pred_check_branch
      %18 = sbr.rel (0) target = $region5
    $region4: #{diffusion_model_forward.1} parent=1 // pred_region
      _
    $region5: #{diffusion_model_forward.1} parent=1 // pred_fallthru
      _
    // Predicated region
    $region6: #{diffusion_model_forward.1} parent=1 // pred_check
      _
    $region7: #{diffusion_model_forward.1} parent=1 // pred_check_branch
      %20 = sbr.rel (0) target = $region9
    $region8: #{diffusion_model_forward.1} parent=1 // pred_region
      _
    $region9: #{diffusion_model_forward.1} parent=1 // pred_fallthru
      _
    // Predicated region
    $region10: #{diffusion_model_forward.1} parent=1 // pred_check
      _
    $region11: #{diffusion_model_forward.1} parent=1 // pred_check_branch
      %22 = sbr.rel (0) target = $region13
    $region12: #{diffusion_model_forward.1} parent=1 // pred_region
      _
    $region13: #{diffusion_model_forward.1} parent=1 // pred_fallthru
      _
    // Predicated region
    $region14: #{diffusion_model_forward.1} parent=1 // pred_check
      _
    $region15: #{diffusion_model_forward.1} parent=1 // pred_check_branch
      %24 = sbr.rel (0) target = $region17
    $region16: #{diffusion_model_forward.1} parent=1 // pred_region
      _
    $region17: #{diffusion_model_forward.1} parent=1 // pred_fallthru
      _
    // Predicated region
    $region18: #{diffusion_model_forward.1} parent=1 // pred_check
      _
    $region19: #{diffusion_model_forward.1} parent=1 // pred_check_branch
      %26 = sbr.rel (0) target = $region21
    $region20: #{diffusion_model_forward.1} parent=1 // pred_region
      _
    $region21: #{diffusion_model_forward.1} parent=1 // pred_fallthru
      _
    // Predicated region
    $region22: #{diffusion_model_forward.1} parent=1 // pred_check
      _
    $region23: #{diffusion_model_forward.1} parent=1 // pred_check_branch
      %28 = sbr.rel (0) target = $region25
    $region24: #{diffusion_model_forward.1} parent=1 // pred_region
      _
    $region25: #{diffusion_model_forward.1} parent=1 // pred_fallthru
      _
    // Predicated region
    $region26: #{diffusion_model_forward.1} parent=1 // pred_check
      _
    $region27: #{diffusion_model_forward.1} parent=1 // pred_check_branch
      %30 = sbr.rel (0) target = $region29
    $region28: #{diffusion_model_forward.1} parent=1 // pred_region
      _
    $region29: #{diffusion_model_forward.1} parent=1 // pred_fallthru
      _
    // Predicated region
    $region30: #{diffusion_model_forward.1} parent=1 // pred_check
      _
    $region31: #{diffusion_model_forward.1} parent=1 // pred_check_branch
      %32 = sbr.rel (0) target = $region33
    $region32: #{diffusion_model_forward.1} parent=1 // pred_region
      %s34 = ssub.s32 2048, 2048
      %35 = vsyncadd [#allocation3], %s34
      %s36 = sshll.u32 [#allocation2], 4
      %s37 = int_to_ptr.vmem [resolvable:$true] %s36
      %42 = dma.hbm_to_vmem [thread:$0]  %s7, 2048, %s37, [#allocation3], 128, 128, 8
    $region33: #{diffusion_model_forward.1} parent=1 // pred_fallthru
      _
    // Predicated region
    $region34: #{diffusion_model_forward.1} parent=1 // pred_check
      _
    $region35: #{diffusion_model_forward.1} parent=1 // pred_check_branch
      %44 = sbr.rel (0) target = $region37
    $region36: #{diffusion_model_forward.1} parent=1 // pred_region
      _
    $region37: #{diffusion_model_forward.1} parent=1 // pred_fallthru
      _
    // Predicated region
    $region38: #{diffusion_model_forward.1} parent=1 // pred_check
      _
    $region39: #{diffusion_model_forward.1} parent=1 // pred_check_branch
      %46 = sbr.rel (0) target = $region41
    $region40: #{diffusion_model_forward.1} parent=1 // pred_region
      _
    $region41: #{diffusion_model_forward.1} parent=1 // pred_fallthru
      _
    // Predicated region
    $region42: #{diffusion_model_forward.1} parent=1 // pred_check
      _
    $region43: #{diffusion_model_forward.1} parent=1 // pred_check_branch
      %48 = sbr.rel (0) target = $region45
    $region44: #{diffusion_model_forward.1} parent=1 // pred_region
      _
    $region45: #{diffusion_model_forward.1} parent=1 // pred_fallthru
      _
    // Predicated region
    $region46: #{diffusion_model_forward.1} parent=1 // pred_check
      _
    $region47: #{diffusion_model_forward.1} parent=1 // pred_check_branch
      %50 = sbr.rel (0) target = $region49
    $region48: #{diffusion_model_forward.1} parent=1 // pred_region
      %51 = dma.done [#allocation3], 2048
    $region49: #{diffusion_model_forward.1} parent=1 // pred_fallthru
      _
    %v52 = vld [vmem:[%s0] sm:$0xff]
    %v53 = vcvt.s32.f32 %v52
    %v54 = vld [vmem:[%s1] sm:$0xff]
    %v55 = vlaneseq
    %v56 = vand.u32 %v55, 127
    %57 = vset.pattern.permute.xlu0 0
    %58 = vperm.xlu0 %57, %v54
    %v59 = vpop.permute.xlu0 %58
    %vm60 = vcmp.eq.s32.totalorder %v59, %v56
    %v61 = vsel %vm60, 1, 0
    %v62 = vcvt.s32.f32 %v61
    %v63 = vld [vmem:[%s2] sm:$0xf]
    %v64 = vld [vmem:[%s3] sm:$0xff]
    %v65 = vld [vmem:[%s3 + $0x8] sm:$0xf]
    %vm66 = vcmask 97280
    %v68 = vsel %vm66, %v62, 0
    %vm70 = vcmask 1043456
    %v72 = vsel %vm70, %v65, 0
    %74 = vmatprep.subr.mxu0 0.0
    %75 = vmatpush1.msra.mxu0 %v64
    %76 = vmatprep.subr.mxu0 0.0
    %77 = vmatpush1.msra.mxu0 %v72
    %78 = vmatprep.subr.mxu0 0.0
    %79 = vmatpush1.msra.mxu0 0.0
    %80 = vmatprep.subr.mxu0 0.0
    %81 = vmatpush1.msra.mxu0 0.0
    %82 = vmatprep.subr.mxu0 0.0
    %83 = vmatpush1.msra.mxu0 0.0
    %84 = vmatprep.subr.mxu0 0.0
    %85 = vmatpush1.msra.mxu0 0.0
    %86 = vmatprep.subr.mxu0 0.0
    %87 = vmatpush1.msra.mxu0 0.0
    %88 = vmatprep.subr.mxu0 0.0
    %89 = vmatpush1.msra.mxu0 0.0
    %90 = vmatprep.subr.mxu0 0.0
    %91 = vmatpush1.msra.mxu0 0.0
    %92 = vmatprep.subr.mxu0 0.0
    %93 = vmatpush1.msra.mxu0 0.0
    %94 = vmatprep.subr.mxu0 0.0
    %95 = vmatpush1.msra.mxu0 0.0
    %96 = vmatprep.subr.mxu0 0.0
    %97 = vmatpush1.msra.mxu0 0.0
    %98 = vmatprep.subr.mxu0 0.0
    %99 = vmatpush1.msra.mxu0 0.0
    %100 = vmatprep.subr.mxu0 0.0
    %101 = vmatpush1.msra.mxu0 0.0
    %102 = vmatprep.subr.mxu0 0.0
    %103 = vmatpush1.msra.mxu0 0.0
    %104 = vmatprep.subr.mxu0 0.0
    %105 = vmatpush1.msra.mxu0 0.0
    %106 = vmatprep.subr.mxu0 0.0
    %107 = vmatpush1.msra.mxu0 0.0
    %108 = vmatprep.subr.mxu0 0.0
    %109 = vmatpush1.msra.mxu0 0.0
    %110 = vmatprep.subr.mxu0 0.0
    %111 = vmatpush1.msra.mxu0 0.0
    %112 = vmatprep.subr.mxu0 0.0
    %113 = vmatpush1.msra.mxu0 0.0
    %114 = vmatprep.subr.mxu0 0.0
    %115 = vmatpush1.msra.mxu0 0.0
    %116 = vmatprep.subr.mxu0 0.0
    %117 = vmatpush1.msra.mxu0 0.0
    %118 = vmatprep.subr.mxu0 0.0
    %119 = vmatpush1.msra.mxu0 0.0
    %120 = vmatprep.subr.mxu0 0.0
    %121 = vmatpush1.msra.mxu0 0.0
    %122 = vmatprep.subr.mxu0 0.0
    %123 = vmatpush1.msra.mxu0 0.0
    %124 = vmatprep.subr.mxu0 0.0
    %125 = vmatpush1.msra.mxu0 0.0
    %126 = vmatprep.subr.mxu0 0.0
    %127 = vmatpush1.msra.mxu0 0.0
    %128 = vmatprep.subr.mxu0 0.0
    %129 = vmatpush1.msra.mxu0 0.0
    %130 = vmatprep.subr.mxu0 0.0
    %131 = vmatpush1.msra.mxu0 0.0
    %132 = vmatprep.subr.mxu0 0.0
    %133 = vmatpush1.msra.mxu0 0.0
    %134 = vmatprep.subr.mxu0 0.0
    %135 = vmatpush1.msra.mxu0 0.0
    %136 = vmatprep.subr.mxu0 0.0
    %137 = vmatpush1.msra.mxu0 0.0
    %138 = vmatprep.mubr.f32.mxu0 0.0
    %139 = vmatmul.mubr.f32.gmra.mrb[0].mxu0 %v68
    %v140 = vpop.f32.mrb[0].mxu0
    %v141 = vadd.f32 0.0, %v140
    %v142 = vpop.f32.mrb[0].mxu0
    %143 = vdwg.mxu0
    %vm144 = vcmask 31744
    %v146 = vsel %vm144, %v53, 0
    %v149 = vsel %vm70, %v63, 0
    %151 = vmatprep.subr.mxu0 0.0
    %152 = vmatpush1.msra.mxu0 %v149
    %153 = vmatprep.subr.mxu0 0.0
    %154 = vmatpush1.msra.mxu0 0.0
    %155 = vmatprep.subr.mxu0 0.0
    %156 = vmatpush1.msra.mxu0 0.0
    %157 = vmatprep.subr.mxu0 0.0
    %158 = vmatpush1.msra.mxu0 0.0
    %159 = vmatprep.subr.mxu0 0.0
    %160 = vmatpush1.msra.mxu0 0.0
    %161 = vmatprep.subr.mxu0 0.0
    %162 = vmatpush1.msra.mxu0 0.0
    %163 = vmatprep.subr.mxu0 0.0
    %164 = vmatpush1.msra.mxu0 0.0
    %165 = vmatprep.subr.mxu0 0.0
    %166 = vmatpush1.msra.mxu0 0.0
    %167 = vmatprep.subr.mxu0 0.0
    %168 = vmatpush1.msra.mxu0 0.0
    %169 = vmatprep.subr.mxu0 0.0
    %170 = vmatpush1.msra.mxu0 0.0
    %171 = vmatprep.subr.mxu0 0.0
    %172 = vmatpush1.msra.mxu0 0.0
    %173 = vmatprep.subr.mxu0 0.0
    %174 = vmatpush1.msra.mxu0 0.0
    %175 = vmatprep.subr.mxu0 0.0
    %176 = vmatpush1.msra.mxu0 0.0
    %177 = vmatprep.subr.mxu0 0.0
    %178 = vmatpush1.msra.mxu0 0.0
    %179 = vmatprep.subr.mxu0 0.0
    %180 = vmatpush1.msra.mxu0 0.0
    %181 = vmatprep.subr.mxu0 0.0
    %182 = vmatpush1.msra.mxu0 0.0
    %183 = vmatprep.subr.mxu0 0.0
    %184 = vmatpush1.msra.mxu0 0.0
    %185 = vmatprep.subr.mxu0 0.0
    %186 = vmatpush1.msra.mxu0 0.0
    %187 = vmatprep.subr.mxu0 0.0
    %188 = vmatpush1.msra.mxu0 0.0
    %189 = vmatprep.subr.mxu0 0.0
    %190 = vmatpush1.msra.mxu0 0.0
    %191 = vmatprep.subr.mxu0 0.0
    %192 = vmatpush1.msra.mxu0 0.0
    %193 = vmatprep.subr.mxu0 0.0
    %194 = vmatpush1.msra.mxu0 0.0
    %195 = vmatprep.subr.mxu0 0.0
    %196 = vmatpush1.msra.mxu0 0.0
    %197 = vmatprep.subr.mxu0 0.0
    %198 = vmatpush1.msra.mxu0 0.0
    %199 = vmatprep.subr.mxu0 0.0
    %200 = vmatpush1.msra.mxu0 0.0
    %201 = vmatprep.subr.mxu0 0.0
    %202 = vmatpush1.msra.mxu0 0.0
    %203 = vmatprep.subr.mxu0 0.0
    %204 = vmatpush1.msra.mxu0 0.0
    %205 = vmatprep.subr.mxu0 0.0
    %206 = vmatpush1.msra.mxu0 0.0
    %207 = vmatprep.subr.mxu0 0.0
    %208 = vmatpush1.msra.mxu0 0.0
    %209 = vmatprep.subr.mxu0 0.0
    %210 = vmatpush1.msra.mxu0 0.0
    %211 = vmatprep.subr.mxu0 0.0
    %212 = vmatpush1.msra.mxu0 0.0
    %213 = vmatprep.subr.mxu0 0.0
    %214 = vmatpush1.msra.mxu0 0.0
    %215 = vmatprep.mubr.f32.mxu0 0.0
    %216 = vmatmul.mubr.f32.gmra.mrb[0].mxu0 %v146
    %v217 = vpop.f32.mrb[0].mxu0
    %v218 = vadd.f32 %v141, %v217
    %v219 = vpop.f32.mrb[0].mxu0
    %220 = vdwg.mxu0
    %v221 = vld [vmem:[%s4] sm:$0x1]
    %v223 = vlaneseq
    %v224 = vshrl.u32 %v223, 7
    %v225 = vsub.s32 0, %v224
    %v226 = vrot.slane %v221, %v225
    %v228 = vadd.f32 %v218, %v226
    %v229 = vmax.f32 %v228, 0.0
    %v230 = vld [vmem:[%s5] sm:$0xff]
    %v231 = vld [vmem:[%s5 + $0x8] sm:$0xff]
    %v232 = vld [vmem:[%s5 + $0x10] sm:$0xff]
    %v233 = vld [vmem:[%s5 + $0x18] sm:$0xff]
    %v234 = vld [vmem:[%s5 + $0x20] sm:$0xff]
    %v235 = vld [vmem:[%s5 + $0x28] sm:$0xff]
    %v236 = vld [vmem:[%s5 + $0x30] sm:$0xff]
    %v237 = vld [vmem:[%s5 + $0x38] sm:$0xff]
    %v238 = vld [vmem:[%s5 + $0x40] sm:$0xff]
    %v239 = vld [vmem:[%s5 + $0x48] sm:$0xff]
    %v240 = vld [vmem:[%s5 + $0x50] sm:$0xff]
    %v241 = vld [vmem:[%s5 + $0x58] sm:$0xff]
    %v242 = vld [vmem:[%s5 + $0x60] sm:$0xff]
    %v243 = vld [vmem:[%s5 + $0x68] sm:$0xff]
    %v244 = vld [vmem:[%s5 + $0x70] sm:$0xff]
    %v245 = vld [vmem:[%s5 + $0x78] sm:$0xff]
    %v246 = vld [vmem:[%s6] sm:$0x1]
    %v248 = vlaneseq
    %v249 = vshrl.u32 %v248, 7
    %v250 = vsub.s32 0, %v249
    %v251 = vrot.slane %v246, %v250
    %253 = vmatprep.subr.mxu0 0.0
    %254 = vmatpush1.msra.mxu0 %v230
    %255 = vmatprep.subr.mxu0 0.0
    %256 = vmatpush1.msra.mxu0 %v231
    %257 = vmatprep.subr.mxu0 0.0
    %258 = vmatpush1.msra.mxu0 %v232
    %259 = vmatprep.subr.mxu0 0.0
    %260 = vmatpush1.msra.mxu0 %v233
    %261 = vmatprep.subr.mxu0 0.0
    %262 = vmatpush1.msra.mxu0 %v234
    %263 = vmatprep.subr.mxu0 0.0
    %264 = vmatpush1.msra.mxu0 %v235
    %265 = vmatprep.subr.mxu0 0.0
    %266 = vmatpush1.msra.mxu0 %v236
    %267 = vmatprep.subr.mxu0 0.0
    %268 = vmatpush1.msra.mxu0 %v237
    %269 = vmatprep.subr.mxu0 0.0
    %270 = vmatpush1.msra.mxu0 %v238
    %271 = vmatprep.subr.mxu0 0.0
    %272 = vmatpush1.msra.mxu0 %v239
    %273 = vmatprep.subr.mxu0 0.0
    %274 = vmatpush1.msra.mxu0 %v240
    %275 = vmatprep.subr.mxu0 0.0
    %276 = vmatpush1.msra.mxu0 %v241
    %277 = vmatprep.subr.mxu0 0.0
    %278 = vmatpush1.msra.mxu0 %v242
    %279 = vmatprep.subr.mxu0 0.0
    %280 = vmatpush1.msra.mxu0 %v243
    %281 = vmatprep.subr.mxu0 0.0
    %282 = vmatpush1.msra.mxu0 %v244
    %283 = vmatprep.subr.mxu0 0.0
    %284 = vmatpush1.msra.mxu0 %v245
    %285 = vmatprep.subr.mxu0 0.0
    %286 = vmatpush1.msra.mxu0 0.0
    %287 = vmatprep.subr.mxu0 0.0
    %288 = vmatpush1.msra.mxu0 0.0
    %289 = vmatprep.subr.mxu0 0.0
    %290 = vmatpush1.msra.mxu0 0.0
    %291 = vmatprep.subr.mxu0 0.0
    %292 = vmatpush1.msra.mxu0 0.0
    %293 = vmatprep.subr.mxu0 0.0
    %294 = vmatpush1.msra.mxu0 0.0
    %295 = vmatprep.subr.mxu0 0.0
    %296 = vmatpush1.msra.mxu0 0.0
    %297 = vmatprep.subr.mxu0 0.0
    %298 = vmatpush1.msra.mxu0 0.0
    %299 = vmatprep.subr.mxu0 0.0
    %300 = vmatpush1.msra.mxu0 0.0
    %301 = vmatprep.subr.mxu0 0.0
    %302 = vmatpush1.msra.mxu0 0.0
    %303 = vmatprep.subr.mxu0 0.0
    %304 = vmatpush1.msra.mxu0 0.0
    %305 = vmatprep.subr.mxu0 0.0
    %306 = vmatpush1.msra.mxu0 0.0
    %307 = vmatprep.subr.mxu0 0.0
    %308 = vmatpush1.msra.mxu0 0.0
    %309 = vmatprep.subr.mxu0 0.0
    %310 = vmatpush1.msra.mxu0 0.0
    %311 = vmatprep.subr.mxu0 0.0
    %312 = vmatpush1.msra.mxu0 0.0
    %313 = vmatprep.subr.mxu0 0.0
    %314 = vmatpush1.msra.mxu0 0.0
    %315 = vmatprep.subr.mxu0 0.0
    %316 = vmatpush1.msra.mxu0 0.0
    %317 = vmatprep.mubr.f32.mxu0 0.0
    %318 = vmatmul.mubr.f32.gmra.mrb[0].mxu0 %v229
    %v319 = vpop.f32.mrb[0].mxu0
    %v320 = vadd.f32 %v251, %v319
    %v321 = vpop.f32.mrb[0].mxu0
    %322 = vdwg.mxu0
    %v323 = vmax.f32 %v320, 0.0
    %v324 = vld [vmem:[#allocation2] sm:$0xff]
    %v325 = vld [vmem:[#allocation2 + $0x8] sm:$0xff]
    %v326 = vld [vmem:[#allocation2 + $0x10] sm:$0xff]
    %v327 = vld [vmem:[#allocation2 + $0x18] sm:$0xff]
    %v328 = vld [vmem:[#allocation2 + $0x20] sm:$0xff]
    %v329 = vld [vmem:[#allocation2 + $0x28] sm:$0xff]
    %v330 = vld [vmem:[#allocation2 + $0x30] sm:$0xff]
    %v331 = vld [vmem:[#allocation2 + $0x38] sm:$0xff]
    %v332 = vld [vmem:[#allocation2 + $0x40] sm:$0xff]
    %v333 = vld [vmem:[#allocation2 + $0x48] sm:$0xff]
    %v334 = vld [vmem:[#allocation2 + $0x50] sm:$0xff]
    %v335 = vld [vmem:[#allocation2 + $0x58] sm:$0xff]
    %v336 = vld [vmem:[#allocation2 + $0x60] sm:$0xff]
    %v337 = vld [vmem:[#allocation2 + $0x68] sm:$0xff]
    %v338 = vld [vmem:[#allocation2 + $0x70] sm:$0xff]
    %v339 = vld [vmem:[#allocation2 + $0x78] sm:$0xff]
    %v340 = vld [vmem:[%s8] sm:$0x1]
    %v342 = vlaneseq
    %v343 = vshrl.u32 %v342, 7
    %v344 = vsub.s32 0, %v343
    %v345 = vrot.slane %v340, %v344
    %347 = vmatprep.subr.mxu0 0.0
    %348 = vmatpush1.msra.mxu0 %v324
    %349 = vmatprep.subr.mxu0 0.0
    %350 = vmatpush1.msra.mxu0 %v325
    %351 = vmatprep.subr.mxu0 0.0
    %352 = vmatpush1.msra.mxu0 %v326
    %353 = vmatprep.subr.mxu0 0.0
    %354 = vmatpush1.msra.mxu0 %v327
    %355 = vmatprep.subr.mxu0 0.0
    %356 = vmatpush1.msra.mxu0 %v328
    %357 = vmatprep.subr.mxu0 0.0
    %358 = vmatpush1.msra.mxu0 %v329
    %359 = vmatprep.subr.mxu0 0.0
    %360 = vmatpush1.msra.mxu0 %v330
    %361 = vmatprep.subr.mxu0 0.0
    %362 = vmatpush1.msra.mxu0 %v331
    %363 = vmatprep.subr.mxu0 0.0
    %364 = vmatpush1.msra.mxu0 %v332
    %365 = vmatprep.subr.mxu0 0.0
    %366 = vmatpush1.msra.mxu0 %v333
    %367 = vmatprep.subr.mxu0 0.0
    %368 = vmatpush1.msra.mxu0 %v334
    %369 = vmatprep.subr.mxu0 0.0
    %370 = vmatpush1.msra.mxu0 %v335
    %371 = vmatprep.subr.mxu0 0.0
    %372 = vmatpush1.msra.mxu0 %v336
    %373 = vmatprep.subr.mxu0 0.0
    %374 = vmatpush1.msra.mxu0 %v337
    %375 = vmatprep.subr.mxu0 0.0
    %376 = vmatpush1.msra.mxu0 %v338
    %377 = vmatprep.subr.mxu0 0.0
    %378 = vmatpush1.msra.mxu0 %v339
    %379 = vmatprep.subr.mxu0 0.0
    %380 = vmatpush1.msra.mxu0 0.0
    %381 = vmatprep.subr.mxu0 0.0
    %382 = vmatpush1.msra.mxu0 0.0
    %383 = vmatprep.subr.mxu0 0.0
    %384 = vmatpush1.msra.mxu0 0.0
    %385 = vmatprep.subr.mxu0 0.0
    %386 = vmatpush1.msra.mxu0 0.0
    %387 = vmatprep.subr.mxu0 0.0
    %388 = vmatpush1.msra.mxu0 0.0
    %389 = vmatprep.subr.mxu0 0.0
    %390 = vmatpush1.msra.mxu0 0.0
    %391 = vmatprep.subr.mxu0 0.0
    %392 = vmatpush1.msra.mxu0 0.0
    %393 = vmatprep.subr.mxu0 0.0
    %394 = vmatpush1.msra.mxu0 0.0
    %395 = vmatprep.subr.mxu0 0.0
    %396 = vmatpush1.msra.mxu0 0.0
    %397 = vmatprep.subr.mxu0 0.0
    %398 = vmatpush1.msra.mxu0 0.0
    %399 = vmatprep.subr.mxu0 0.0
    %400 = vmatpush1.msra.mxu0 0.0
    %401 = vmatprep.subr.mxu0 0.0
    %402 = vmatpush1.msra.mxu0 0.0
    %403 = vmatprep.subr.mxu0 0.0
    %404 = vmatpush1.msra.mxu0 0.0
    %405 = vmatprep.subr.mxu0 0.0
    %406 = vmatpush1.msra.mxu0 0.0
    %407 = vmatprep.subr.mxu0 0.0
    %408 = vmatpush1.msra.mxu0 0.0
    %409 = vmatprep.subr.mxu0 0.0
    %410 = vmatpush1.msra.mxu0 0.0
    %411 = vmatprep.mubr.f32.mxu0 0.0
    %412 = vmatmul.mubr.f32.gmra.mrb[0].mxu0 %v323
    %v413 = vpop.f32.mrb[0].mxu0
    %v414 = vadd.f32 %v345, %v413
    %v415 = vpop.f32.mrb[0].mxu0
    %416 = vdwg.mxu0
    %v417 = vmax.f32 %v414, 0.0
    %v418 = vld [vmem:[%s9] sm:$0xff]
    %v419 = vld [vmem:[%s9 + $0x8] sm:$0xff]
    %v420 = vld [vmem:[%s9 + $0x10] sm:$0xff]
    %v421 = vld [vmem:[%s9 + $0x18] sm:$0xff]
    %v422 = vld [vmem:[%s9 + $0x20] sm:$0xff]
    %v423 = vld [vmem:[%s9 + $0x28] sm:$0xff]
    %v424 = vld [vmem:[%s9 + $0x30] sm:$0xff]
    %v425 = vld [vmem:[%s9 + $0x38] sm:$0xff]
    %v426 = vld [vmem:[%s9 + $0x40] sm:$0xff]
    %v427 = vld [vmem:[%s9 + $0x48] sm:$0xff]
    %v428 = vld [vmem:[%s9 + $0x50] sm:$0xff]
    %v429 = vld [vmem:[%s9 + $0x58] sm:$0xff]
    %v430 = vld [vmem:[%s9 + $0x60] sm:$0xff]
    %v431 = vld [vmem:[%s9 + $0x68] sm:$0xff]
    %v432 = vld [vmem:[%s9 + $0x70] sm:$0xff]
    %v433 = vld [vmem:[%s9 + $0x78] sm:$0xff]
    %v434 = vld [vmem:[%s10] sm:$0x1]
    %v436 = vlaneseq
    %v437 = vshrl.u32 %v436, 7
    %v438 = vsub.s32 0, %v437
    %v439 = vrot.slane %v434, %v438
    %441 = vmatprep.subr.mxu0 0.0
    %442 = vmatpush1.msra.mxu0 %v418
    %443 = vmatprep.subr.mxu0 0.0
    %444 = vmatpush1.msra.mxu0 %v419
    %445 = vmatprep.subr.mxu0 0.0
    %446 = vmatpush1.msra.mxu0 %v420
    %447 = vmatprep.subr.mxu0 0.0
    %448 = vmatpush1.msra.mxu0 %v421
    %449 = vmatprep.subr.mxu0 0.0
    %450 = vmatpush1.msra.mxu0 %v422
    %451 = vmatprep.subr.mxu0 0.0
    %452 = vmatpush1.msra.mxu0 %v423
    %453 = vmatprep.subr.mxu0 0.0
    %454 = vmatpush1.msra.mxu0 %v424
    %455 = vmatprep.subr.mxu0 0.0
    %456 = vmatpush1.msra.mxu0 %v425
    %457 = vmatprep.subr.mxu0 0.0
    %458 = vmatpush1.msra.mxu0 %v426
    %459 = vmatprep.subr.mxu0 0.0
    %460 = vmatpush1.msra.mxu0 %v427
    %461 = vmatprep.subr.mxu0 0.0
    %462 = vmatpush1.msra.mxu0 %v428
    %463 = vmatprep.subr.mxu0 0.0
    %464 = vmatpush1.msra.mxu0 %v429
    %465 = vmatprep.subr.mxu0 0.0
    %466 = vmatpush1.msra.mxu0 %v430
    %467 = vmatprep.subr.mxu0 0.0
    %468 = vmatpush1.msra.mxu0 %v431
    %469 = vmatprep.subr.mxu0 0.0
    %470 = vmatpush1.msra.mxu0 %v432
    %471 = vmatprep.subr.mxu0 0.0
    %472 = vmatpush1.msra.mxu0 %v433
    %473 = vmatprep.subr.mxu0 0.0
    %474 = vmatpush1.msra.mxu0 0.0
    %475 = vmatprep.subr.mxu0 0.0
    %476 = vmatpush1.msra.mxu0 0.0
    %477 = vmatprep.subr.mxu0 0.0
    %478 = vmatpush1.msra.mxu0 0.0
    %479 = vmatprep.subr.mxu0 0.0
    %480 = vmatpush1.msra.mxu0 0.0
    %481 = vmatprep.subr.mxu0 0.0
    %482 = vmatpush1.msra.mxu0 0.0
    %483 = vmatprep.subr.mxu0 0.0
    %484 = vmatpush1.msra.mxu0 0.0
    %485 = vmatprep.subr.mxu0 0.0
    %486 = vmatpush1.msra.mxu0 0.0
    %487 = vmatprep.subr.mxu0 0.0
    %488 = vmatpush1.msra.mxu0 0.0
    %489 = vmatprep.subr.mxu0 0.0
    %490 = vmatpush1.msra.mxu0 0.0
    %491 = vmatprep.subr.mxu0 0.0
    %492 = vmatpush1.msra.mxu0 0.0
    %493 = vmatprep.subr.mxu0 0.0
    %494 = vmatpush1.msra.mxu0 0.0
    %495 = vmatprep.subr.mxu0 0.0
    %496 = vmatpush1.msra.mxu0 0.0
    %497 = vmatprep.subr.mxu0 0.0
    %498 = vmatpush1.msra.mxu0 0.0
    %499 = vmatprep.subr.mxu0 0.0
    %500 = vmatpush1.msra.mxu0 0.0
    %501 = vmatprep.subr.mxu0 0.0
    %502 = vmatpush1.msra.mxu0 0.0
    %503 = vmatprep.subr.mxu0 0.0
    %504 = vmatpush1.msra.mxu0 0.0
    %505 = vmatprep.mubr.f32.mxu0 0.0
    %506 = vmatmul.mubr.f32.gmra.mrb[0].mxu0 %v417
    %v507 = vpop.f32.mrb[0].mxu0
    %v508 = vadd.f32 %v439, %v507
    %v509 = vpop.f32.mrb[0].mxu0
    %510 = vdwg.mxu0
    %vm511 = vcmask 261120
    %512 = vst.msk [vmem:[%s11] sm:$0xff] %vm511, %v508
    // Predicated region
    $region50: #{diffusion_model_forward.1} parent=1 // pred_check
      _
    $region51: #{diffusion_model_forward.1} parent=1 // pred_check_branch
      %514 = sbr.rel (0) target = $region53
    $region52: #{diffusion_model_forward.1} parent=1 // pred_region
      _
    $region53: #{diffusion_model_forward.1} parent=1 // pred_fallthru
      _
    // Predicated region
    $region54: #{diffusion_model_forward.1} parent=1 // pred_check
      _
    $region55: #{diffusion_model_forward.1} parent=1 // pred_check_branch
      %516 = sbr.rel (0) target = $region57
    $region56: #{diffusion_model_forward.1} parent=1 // pred_region
      _
    $region57: #{diffusion_model_forward.1} parent=1 // pred_fallthru
      _
    %517 = vsyncpa [#allocation3], 1

</llo_original>
